<compile_context>
chip_gen: v7x
topology: tpu7x:2x2x1
jax: 0.10.0
libtpu: 0.0.40
codegen_flags: <defaults>
</compile_context>

<pallas_src>
import jax
import jax.numpy as jnp
from jax import lax
from jax.experimental import pallas as pl
from jax.experimental.pallas import tpu as pltpu

# ----------------------------- configuration --------------------------------
ACT_ALPHA = 0.2     # leaky-relu negative slope of every hidden GeneralConv
EPS = 1e-8          # MinibatchStddev epsilon
IKS = 8             # initial_kernel_size == signal length at depth 0
K_SIZE = 3          # kernel_size
CH_RGB = 2          # num_rgb_channels
NF0 = 32            # nf(0): DBlock ch_out
NF1 = 16            # nf(1): DBlock ch_in (= hidden_size, deep=False)
BATCH = 4           # == group_size (single minibatch-stddev group)


# ------------------------------ Pallas kernel --------------------------------

def _disc_kernel(x_ref, wr_ref, br_ref, w1_ref, b1_ref, w2_ref, b2_ref,
                 w3_ref, b3_ref, o_ref, h_ref):
    """Whole depth-0 Discriminator forward, batch folded into lanes.

    x_ref : [CR, B*T]              input signal (lane index = b*T + t)
    wr_ref: [CIN, CR]              from_rgb 1x1 weight
    br_ref: [CIN, 1]               from_rgb bias
    w1_ref: [HID, K*(CIN+1)]       k=3 conv, im2col layout (k-major, c-minor)
    b1_ref: [HID, 1]
    w2_ref: [C0, T*HID]            k=T conv (linear-last), im2col layout
    b2_ref: [C0, 1]
    w3_ref: [C0, 1]                final 1x1 linear (C_out=1)
    b3_ref: [1, 1]
    o_ref : [1, B]                 discriminator scores
    h_ref : [C0, B]                last feature map (transposed back in wrapper)
    """
    CR, BT = x_ref.shape
    CIN = br_ref.shape[0]                 # 16
    HID = b1_ref.shape[0]                 # 16
    C0 = b2_ref.shape[0]                  # 32
    T = w2_ref.shape[1] // HID            # 8
    B = BT // T                           # 4

    x = x_ref[...]

    # ---- from_rgb: 1x1 conv (C_in=2) + LeakyReLU, on the VPU (no MXU),
    #      all batches at once ----
    h1 = wr_ref[:, 0:1] * x[0:1, :]
    for r in range(1, CR):
        h1 = h1 + wr_ref[:, r:r + 1] * x[r:r + 1, :]
    h1 = h1 + br_ref[...]
    h1 = jnp.where(h1 >= 0.0, h1, h1 * ACT_ALPHA)               # [CIN, B*T]

    # ---- MinibatchStddev: single group (group_size == B), single temporal
    #      group over the full window ----
    parts = [h1[:, b * T:(b + 1) * T] for b in range(B)]        # B x [CIN, T]
    mean = parts[0]
    for p in parts[1:]:
        mean = mean + p
    mean = mean * (1.0 / B)                                     # [CIN, T]
    var = (parts[0] - mean) ** 2
    for p in parts[1:]:
        var = var + (p - mean) ** 2
    var = var * (1.0 / B)
    sd = jnp.sqrt(var + EPS)                                    # [CIN, T]
    stat = jnp.mean(jnp.mean(sd, axis=1, keepdims=True),
                    axis=0, keepdims=True)                      # [1, 1]
    std_row = jnp.broadcast_to(stat, (1, BT))                   # [1, B*T]
    h17 = jnp.concatenate([h1, std_row], axis=0)                # [CIN+1, B*T]

    # ---- conv k=3, pad=1 over CIN+1 channels: masked lane shifts replace the
    #      per-batch zero-pad loop; batch stays folded into lanes so the whole
    #      layer is ONE MXU matmul ----
    C17 = CIN + 1
    t_pos = lax.broadcasted_iota(jnp.int32, (C17, BT), 1) % T
    zcol = jnp.zeros((C17, 1), jnp.float32)
    left = jnp.concatenate([zcol, h17[:, :BT - 1]], axis=1)     # value at t-1
    left = jnp.where(t_pos == 0, 0.0, left)
    right = jnp.concatenate([h17[:, 1:], zcol], axis=1)         # value at t+1
    right = jnp.where(t_pos == T - 1, 0.0, right)
    cols = jnp.concatenate([left, h17, right], axis=0)          # [K*(CIN+1), B*T]
    y1 = jnp.dot(w1_ref[...], cols,
                 preferred_element_type=jnp.float32) + b1_ref[...]
    y1 = jnp.where(y1 >= 0.0, y1, y1 * ACT_ALPHA)               # [HID, B*T]

    # ---- conv k=T (linear-last, pad=0, T_out=1): flatten (k, c) so the whole
    #      layer is ONE matmul with a T*HID = 128-wide contraction ----
    col2_list = []
    for b in range(B):
        hb = y1[:, b * T:(b + 1) * T]                           # [HID, T]
        col2_list.append(
            jnp.concatenate([hb[:, k:k + 1] for k in range(T)], axis=0))
    cols2 = jnp.concatenate(col2_list, axis=1)                  # [T*HID, B]
    y2 = jnp.dot(w2_ref[...], cols2,
                 preferred_element_type=jnp.float32) + b2_ref[...]
    y2 = jnp.where(y2 >= 0.0, y2, y2 * ACT_ALPHA)               # [C0, B]

    # ---- final 1x1 linear (C_out=1, no act): VPU multiply + sublane reduce.
    #      mean(dim=2) is a no-op because T_out == 1. ----
    o = jnp.sum(y2 * w3_ref[...], axis=0, keepdims=True) + b3_ref[...]   # [1, B]

    o_ref[...] = o.astype(o_ref.dtype)
    h_ref[...] = y2.astype(h_ref.dtype)                         # single slab store


# ------------------------------- wrapper --------------------------------------

def discriminator_forward(params, x, y=None):
    """Discriminator.forward(x, y=None) at depth=0 -> (o, h, attention_maps)."""
    assert y is None  # num_classes == 0 -> cond_loss = 0.0
    B, _, T = x.shape
    wr, br = params['from_rgb']
    w1, b1 = params['conv0']
    w2, b2 = params['conv1']
    w3, b3 = params['linear']
    CIN = wr.shape[0]
    HID = w1.shape[0]
    C0 = w2.shape[0]
    K = w1.shape[2]

    # One-time layout prep (wrapper level, outside the kernel):
    #   batch folded into lanes; im2col weights in (k-major, c-minor) layout.
    x_lanes = jnp.transpose(x, (1, 0, 2)).reshape(CH_RGB, B * T)         # [CR, B*T]
    wr_2d = wr[:, :, 0]                                                  # [CIN, CR]
    w1_2d = jnp.transpose(w1, (0, 2, 1)).reshape(HID, K * (CIN + 1))     # [HID, K*(CIN+1)]
    w2_2d = jnp.transpose(w2, (0, 2, 1)).reshape(C0, T * HID)            # [C0, T*HID]
    w3_col = w3.reshape(C0, 1)                                           # [C0, 1]

    vmem = pl.BlockSpec(memory_space=pltpu.MemorySpace.VMEM)
    o2d, h2d = pl.pallas_call(
        _disc_kernel,
        out_shape=(jax.ShapeDtypeStruct((1, B), jnp.float32),
                   jax.ShapeDtypeStruct((C0, B), jnp.float32)),
        in_specs=[vmem] * 9,
        out_specs=(vmem, vmem),
    )(x_lanes, wr_2d, br.reshape(CIN, 1), w1_2d, b1.reshape(HID, 1),
      w2_2d, b2.reshape(C0, 1), w3_col, b3.reshape(1, 1))

    o = o2d[0]                                  # [B]  (== o + cond_loss, cond_loss = 0.0)
    h = jnp.transpose(h2d)[:, :, None]          # [B, C0, 1]
    return o, h, {}                             # (scores, last feature map, attention maps)


# --------------------------- parameters (glue) --------------------------------

def _init_conv(key, c_out, c_in, k):
    kw, kb = jax.random.split(key)
    w = jax.random.normal(kw, (c_out, c_in, k), jnp.float32) * 0.05
    b = jax.random.normal(kb, (c_out,), jnp.float32) * 0.01
    return w, b


def init_params(key):
    ks = jax.random.split(key, 4)
    return {
        'from_rgb': _init_conv(ks[0], NF1, CH_RGB, 1),        # DBlock.from_rgb (1x1)
        'conv0':    _init_conv(ks[1], NF1, NF1 + 1, K_SIZE),  # DBlock.net[1] (after MinibatchStddev)
        'conv1':    _init_conv(ks[2], NF0, NF1, IKS),         # DBlock.net[2] (linear-last, pad=0)
        'linear':   _init_conv(ks[3], 1, NF0, 1),             # Discriminator.linear (1x1)
    }


# ------------------------- pure-JAX reference check ---------------------------

def _conv1d_ref(x, w, b, pad, act_alpha):
    y = lax.conv_general_dilated(x, w, (1,), [(pad, pad)],
                                 dimension_numbers=('NCH', 'OIH', 'NCH'),
                                 precision=lax.Precision.HIGHEST)
    y = y + b[None, :, None]
    if act_alpha >= 0:
        y = jnp.where(y >= 0, y, y * act_alpha)
    return y


def _minibatch_stddev_ref(x):
    m = jnp.mean(x, axis=0, keepdims=True)
    v = jnp.mean((x - m) ** 2, axis=0, keepdims=True)
    stat = jnp.mean(jnp.sqrt(v + EPS))
    s = jnp.broadcast_to(stat, (x.shape[0], 1, x.shape[2]))
    return jnp.concatenate([x, s], axis=1)


def discriminator_forward_ref(params, x):
    h = _conv1d_ref(x, *params['from_rgb'], 0, ACT_ALPHA)
    h = _minibatch_stddev_ref(h)
    h = _conv1d_ref(h, *params['conv0'], K_SIZE // 2, ACT_ALPHA)
    h = _conv1d_ref(h, *params['conv1'], 0, ACT_ALPHA)        # [B, NF0, 1]
    o = _conv1d_ref(h, *params['linear'], 0, -1.0)            # [B, 1, 1]
    o = jnp.squeeze(jnp.mean(o, axis=2))                      # [B]
    return o, h


# ----------------------------------- main --------------------------------------

if __name__ == "__main__":
    key = jax.random.PRNGKey(0)
    kp, kx = jax.random.split(key)
    params = init_params(kp)
    x = jax.random.normal(kx, (BATCH, CH_RGB, IKS), jnp.float32)   # [B, ch_rgb, T]

    o, h, attn = jax.jit(discriminator_forward)(params, x)
    (o, h) = jax.block_until_ready((o, h))

    o_ref, h_ref = discriminator_forward_ref(params, x)
    assert o.shape == (BATCH,), o.shape
    assert h.shape == (BATCH, NF0, 1), h.shape
    assert attn == {}
    assert jnp.allclose(o, o_ref, atol=1e-4, rtol=1e-4), \
        float(jnp.max(jnp.abs(o - o_ref)))
    assert jnp.allclose(h, h_ref, atol=1e-4, rtol=1e-4), \
        float(jnp.max(jnp.abs(h - h_ref)))
    print("KERNEL_OK")
</pallas_src>

<mosaic_0001>
module attributes {stable_mosaic.version = 11 : i64} {
  func.func @_disc_kernel(%arg0: memref<2x32xf32, #tpu.memory_space<vmem>>, %arg1: memref<16x2xf32, #tpu.memory_space<vmem>>, %arg2: memref<16x1xf32, #tpu.memory_space<vmem>>, %arg3: memref<16x51xf32, #tpu.memory_space<vmem>>, %arg4: memref<16x1xf32, #tpu.memory_space<vmem>>, %arg5: memref<32x128xf32, #tpu.memory_space<vmem>>, %arg6: memref<32x1xf32, #tpu.memory_space<vmem>>, %arg7: memref<32x1xf32, #tpu.memory_space<vmem>>, %arg8: memref<1x1xf32, #tpu.memory_space<vmem>>, %arg9: memref<1x4xf32, #tpu.memory_space<vmem>>, %arg10: memref<32x4xf32, #tpu.memory_space<vmem>>) attributes {dimension_semantics = [], scalar_prefetch = 0 : i64, scratch_operands = 0 : i64, tpu.core_type = #tpu.core_type<tc>} {
    %c0 = arith.constant 0 : index
    %c0_0 = arith.constant 0 : index
    %0 = vector.load %arg0[%c0, %c0_0] : memref<2x32xf32, #tpu.memory_space<vmem>>, vector<2x32xf32>
    %c0_1 = arith.constant 0 : index
    %c0_2 = arith.constant 0 : index
    %1 = vector.load %arg1[%c0_1, %c0_2] : memref<16x2xf32, #tpu.memory_space<vmem>>, vector<16x1xf32>
    %2 = vector.extract_strided_slice %0 {offsets = [0, 0], sizes = [1, 32], strides = [1, 1]} : vector<2x32xf32> to vector<1x32xf32>
    %3 = vector.broadcast %1 : vector<16x1xf32> to vector<16x32xf32>
    %4 = vector.broadcast %2 : vector<1x32xf32> to vector<16x32xf32>
    %5 = arith.mulf %3, %4 : vector<16x32xf32>
    %c0_3 = arith.constant 0 : index
    %c1 = arith.constant 1 : index
    %6 = vector.load %arg1[%c0_3, %c1] : memref<16x2xf32, #tpu.memory_space<vmem>>, vector<16x1xf32>
    %7 = vector.extract_strided_slice %0 {offsets = [1, 0], sizes = [1, 32], strides = [1, 1]} : vector<2x32xf32> to vector<1x32xf32>
    %8 = vector.broadcast %6 : vector<16x1xf32> to vector<16x32xf32>
    %9 = vector.broadcast %7 : vector<1x32xf32> to vector<16x32xf32>
    %10 = arith.mulf %8, %9 : vector<16x32xf32>
    %11 = arith.addf %5, %10 : vector<16x32xf32>
    %c0_4 = arith.constant 0 : index
    %c0_5 = arith.constant 0 : index
    %12 = vector.load %arg2[%c0_4, %c0_5] : memref<16x1xf32, #tpu.memory_space<vmem>>, vector<16x1xf32>
    %13 = vector.broadcast %12 : vector<16x1xf32> to vector<16x32xf32>
    %14 = arith.addf %11, %13 : vector<16x32xf32>
    %cst = arith.constant 0.000000e+00 : f32
    %15 = vector.broadcast %cst : f32 to vector<16x32xf32>
    %16 = arith.cmpf oge, %14, %15 : vector<16x32xf32>
    %cst_6 = arith.constant 2.000000e-01 : f32
    %17 = vector.broadcast %cst_6 : f32 to vector<16x32xf32>
    %18 = arith.mulf %14, %17 : vector<16x32xf32>
    %19 = arith.select %16, %14, %18 : vector<16x32xi1>, vector<16x32xf32>
    %20 = vector.extract_strided_slice %19 {offsets = [0, 0], sizes = [16, 8], strides = [1, 1]} : vector<16x32xf32> to vector<16x8xf32>
    %21 = vector.extract_strided_slice %19 {offsets = [0, 8], sizes = [16, 8], strides = [1, 1]} : vector<16x32xf32> to vector<16x8xf32>
    %22 = vector.extract_strided_slice %19 {offsets = [0, 16], sizes = [16, 8], strides = [1, 1]} : vector<16x32xf32> to vector<16x8xf32>
    %23 = vector.extract_strided_slice %19 {offsets = [0, 24], sizes = [16, 8], strides = [1, 1]} : vector<16x32xf32> to vector<16x8xf32>
    %24 = arith.addf %20, %21 : vector<16x8xf32>
    %25 = arith.addf %24, %22 : vector<16x8xf32>
    %26 = arith.addf %25, %23 : vector<16x8xf32>
    %cst_7 = arith.constant 2.500000e-01 : f32
    %27 = vector.broadcast %cst_7 : f32 to vector<16x8xf32>
    %28 = arith.mulf %26, %27 : vector<16x8xf32>
    %29 = arith.subf %20, %28 : vector<16x8xf32>
    %30 = arith.mulf %29, %29 : vector<16x8xf32>
    %31 = arith.subf %21, %28 : vector<16x8xf32>
    %32 = arith.mulf %31, %31 : vector<16x8xf32>
    %33 = arith.addf %30, %32 : vector<16x8xf32>
    %34 = arith.subf %22, %28 : vector<16x8xf32>
    %35 = arith.mulf %34, %34 : vector<16x8xf32>
    %36 = arith.addf %33, %35 : vector<16x8xf32>
    %37 = arith.subf %23, %28 : vector<16x8xf32>
    %38 = arith.mulf %37, %37 : vector<16x8xf32>
    %39 = arith.addf %36, %38 : vector<16x8xf32>
    %cst_8 = arith.constant 2.500000e-01 : f32
    %40 = vector.broadcast %cst_8 : f32 to vector<16x8xf32>
    %41 = arith.mulf %39, %40 : vector<16x8xf32>
    %cst_9 = arith.constant 9.99999993E-9 : f32
    %42 = vector.broadcast %cst_9 : f32 to vector<16x8xf32>
    %43 = arith.addf %41, %42 : vector<16x8xf32>
    %44 = math.sqrt %43 : vector<16x8xf32>
    %cst_10 = arith.constant dense<0.000000e+00> : vector<16xf32>
    %45 = vector.multi_reduction <add>, %44, %cst_10 [1] : vector<16x8xf32> to vector<16xf32>
    %46 = vector.shape_cast %45 : vector<16xf32> to vector<16x1xf32>
    %cst_11 = arith.constant 8.000000e+00 : f32
    %47 = vector.broadcast %cst_11 : f32 to vector<16x1xf32>
    %48 = arith.divf %46, %47 : vector<16x1xf32>
    %cst_12 = arith.constant dense<0.000000e+00> : vector<1xf32>
    %49 = vector.multi_reduction <add>, %48, %cst_12 [0] : vector<16x1xf32> to vector<1xf32>
    %50 = vector.shape_cast %49 : vector<1xf32> to vector<1x1xf32>
    %cst_13 = arith.constant 1.600000e+01 : f32
    %51 = vector.broadcast %cst_13 : f32 to vector<1x1xf32>
    %52 = arith.divf %50, %51 : vector<1x1xf32>
    %53 = vector.shape_cast %52 : vector<1x1xf32> to vector<1x1xf32>
    %54 = vector.broadcast %53 : vector<1x1xf32> to vector<1x32xf32>
    %55 = tpu.concatenate %19, %54 in 0 : vector<16x32xf32>, vector<1x32xf32> -> vector<17x32xf32>
    %56 = tpu.iota {dimensions = array<i32: 1>} : vector<17x32xi32>
    %c8_i32 = arith.constant 8 : i32
    %c0_i32 = arith.constant 0 : i32
    %57 = arith.cmpi eq, %c8_i32, %c0_i32 : i32
    %c1_i32 = arith.constant 1 : i32
    %58 = arith.select %57, %c1_i32, %c8_i32 : i32
    %59 = vector.broadcast %58 : i32 to vector<17x32xi32>
    %60 = arith.remsi %56, %59 : vector<17x32xi32>
    %c0_i32_14 = arith.constant 0 : i32
    %61 = vector.broadcast %c0_i32_14 : i32 to vector<17x32xi32>
    %62 = arith.cmpi ne, %60, %61 : vector<17x32xi32>
    %c0_i32_15 = arith.constant 0 : i32
    %63 = vector.broadcast %c0_i32_15 : i32 to vector<17x32xi32>
    %64 = arith.cmpi slt, %60, %63 : vector<17x32xi32>
    %c0_i32_16 = arith.constant 0 : i32
    %65 = arith.cmpi slt, %58, %c0_i32_16 : i32
    %66 = vector.broadcast %65 : i1 to vector<17x32xi1>
    %67 = vector.broadcast %66 : vector<17x32xi1> to vector<17x32xi1>
    %68 = arith.xori %64, %67 : vector<17x32xi1>
    %69 = arith.andi %68, %62 : vector<17x32xi1>
    %70 = vector.broadcast %58 : i32 to vector<17x32xi32>
    %71 = arith.addi %60, %70 : vector<17x32xi32>
    %72 = arith.select %69, %71, %60 : vector<17x32xi1>, vector<17x32xi32>
    %cst_17 = arith.constant 0.000000e+00 : f32
    %73 = vector.broadcast %cst_17 : f32 to vector<17x1xf32>
    %74 = vector.extract_strided_slice %55 {offsets = [0, 0], sizes = [17, 31], strides = [1, 1]} : vector<17x32xf32> to vector<17x31xf32>
    %75 = tpu.concatenate %73, %74 in 1 : vector<17x1xf32>, vector<17x31xf32> -> vector<17x32xf32>
    %c0_i32_18 = arith.constant 0 : i32
    %76 = vector.broadcast %c0_i32_18 : i32 to vector<17x32xi32>
    %77 = arith.cmpi eq, %72, %76 : vector<17x32xi32>
    %cst_19 = arith.constant 0.000000e+00 : f32
    %78 = vector.broadcast %cst_19 : f32 to vector<17x32xf32>
    %79 = arith.select %77, %78, %75 : vector<17x32xi1>, vector<17x32xf32>
    %80 = vector.extract_strided_slice %55 {offsets = [0, 1], sizes = [17, 31], strides = [1, 1]} : vector<17x32xf32> to vector<17x31xf32>
    %81 = tpu.concatenate %80, %73 in 1 : vector<17x31xf32>, vector<17x1xf32> -> vector<17x32xf32>
    %c7_i32 = arith.constant 7 : i32
    %82 = vector.broadcast %c7_i32 : i32 to vector<17x32xi32>
    %83 = arith.cmpi eq, %72, %82 : vector<17x32xi32>
    %cst_20 = arith.constant 0.000000e+00 : f32
    %84 = vector.broadcast %cst_20 : f32 to vector<17x32xf32>
    %85 = arith.select %83, %84, %81 : vector<17x32xi1>, vector<17x32xf32>
    %86 = tpu.concatenate %79, %55, %85 in 0 : vector<17x32xf32>, vector<17x32xf32>, vector<17x32xf32> -> vector<51x32xf32>
    %c0_21 = arith.constant 0 : index
    %c0_22 = arith.constant 0 : index
    %87 = vector.load %arg3[%c0_21, %c0_22] : memref<16x51xf32, #tpu.memory_space<vmem>>, vector<16x51xf32>
    %cst_23 = arith.constant dense<0.000000e+00> : vector<16x32xf32>
    %88 = tpu.matmul %87, %86, %cst_23 {dimension_numbers = #tpu.dot_dimension_numbers<[1], [0], [0], [1], [0, 0, 1, 1], [], []>} : vector<16x51xf32>, vector<51x32xf32>, vector<16x32xf32> -> vector<16x32xf32>
    %c0_24 = arith.constant 0 : index
    %c0_25 = arith.constant 0 : index
    %89 = vector.load %arg4[%c0_24, %c0_25] : memref<16x1xf32, #tpu.memory_space<vmem>>, vector<16x1xf32>
    %90 = vector.broadcast %89 : vector<16x1xf32> to vector<16x32xf32>
    %91 = arith.addf %88, %90 : vector<16x32xf32>
    %cst_26 = arith.constant 0.000000e+00 : f32
    %92 = vector.broadcast %cst_26 : f32 to vector<16x32xf32>
    %93 = arith.cmpf oge, %91, %92 : vector<16x32xf32>
    %cst_27 = arith.constant 2.000000e-01 : f32
    %94 = vector.broadcast %cst_27 : f32 to vector<16x32xf32>
    %95 = arith.mulf %91, %94 : vector<16x32xf32>
    %96 = arith.select %93, %91, %95 : vector<16x32xi1>, vector<16x32xf32>
    %97 = vector.extract_strided_slice %96 {offsets = [0, 0], sizes = [16, 8], strides = [1, 1]} : vector<16x32xf32> to vector<16x8xf32>
    %98 = vector.extract_strided_slice %97 {offsets = [0, 0], sizes = [16, 1], strides = [1, 1]} : vector<16x8xf32> to vector<16x1xf32>
    %99 = vector.extract_strided_slice %97 {offsets = [0, 1], sizes = [16, 1], strides = [1, 1]} : vector<16x8xf32> to vector<16x1xf32>
    %100 = vector.extract_strided_slice %97 {offsets = [0, 2], sizes = [16, 1], strides = [1, 1]} : vector<16x8xf32> to vector<16x1xf32>
    %101 = vector.extract_strided_slice %97 {offsets = [0, 3], sizes = [16, 1], strides = [1, 1]} : vector<16x8xf32> to vector<16x1xf32>
    %102 = vector.extract_strided_slice %97 {offsets = [0, 4], sizes = [16, 1], strides = [1, 1]} : vector<16x8xf32> to vector<16x1xf32>
    %103 = vector.extract_strided_slice %97 {offsets = [0, 5], sizes = [16, 1], strides = [1, 1]} : vector<16x8xf32> to vector<16x1xf32>
    %104 = vector.extract_strided_slice %97 {offsets = [0, 6], sizes = [16, 1], strides = [1, 1]} : vector<16x8xf32> to vector<16x1xf32>
    %105 = vector.extract_strided_slice %97 {offsets = [0, 7], sizes = [16, 1], strides = [1, 1]} : vector<16x8xf32> to vector<16x1xf32>
    %106 = tpu.concatenate %98, %99, %100, %101, %102, %103, %104, %105 in 0 : vector<16x1xf32>, vector<16x1xf32>, vector<16x1xf32>, vector<16x1xf32>, vector<16x1xf32>, vector<16x1xf32>, vector<16x1xf32>, vector<16x1xf32> -> vector<128x1xf32>
    %107 = vector.extract_strided_slice %96 {offsets = [0, 8], sizes = [16, 8], strides = [1, 1]} : vector<16x32xf32> to vector<16x8xf32>
    %108 = vector.extract_strided_slice %107 {offsets = [0, 0], sizes = [16, 1], strides = [1, 1]} : vector<16x8xf32> to vector<16x1xf32>
    %109 = vector.extract_strided_slice %107 {offsets = [0, 1], sizes = [16, 1], strides = [1, 1]} : vector<16x8xf32> to vector<16x1xf32>
    %110 = vector.extract_strided_slice %107 {offsets = [0, 2], sizes = [16, 1], strides = [1, 1]} : vector<16x8xf32> to vector<16x1xf32>
    %111 = vector.extract_strided_slice %107 {offsets = [0, 3], sizes = [16, 1], strides = [1, 1]} : vector<16x8xf32> to vector<16x1xf32>
    %112 = vector.extract_strided_slice %107 {offsets = [0, 4], sizes = [16, 1], strides = [1, 1]} : vector<16x8xf32> to vector<16x1xf32>
    %113 = vector.extract_strided_slice %107 {offsets = [0, 5], sizes = [16, 1], strides = [1, 1]} : vector<16x8xf32> to vector<16x1xf32>
    %114 = vector.extract_strided_slice %107 {offsets = [0, 6], sizes = [16, 1], strides = [1, 1]} : vector<16x8xf32> to vector<16x1xf32>
    %115 = vector.extract_strided_slice %107 {offsets = [0, 7], sizes = [16, 1], strides = [1, 1]} : vector<16x8xf32> to vector<16x1xf32>
    %116 = tpu.concatenate %108, %109, %110, %111, %112, %113, %114, %115 in 0 : vector<16x1xf32>, vector<16x1xf32>, vector<16x1xf32>, vector<16x1xf32>, vector<16x1xf32>, vector<16x1xf32>, vector<16x1xf32>, vector<16x1xf32> -> vector<128x1xf32>
    %117 = vector.extract_strided_slice %96 {offsets = [0, 16], sizes = [16, 8], strides = [1, 1]} : vector<16x32xf32> to vector<16x8xf32>
    %118 = vector.extract_strided_slice %117 {offsets = [0, 0], sizes = [16, 1], strides = [1, 1]} : vector<16x8xf32> to vector<16x1xf32>
    %119 = vector.extract_strided_slice %117 {offsets = [0, 1], sizes = [16, 1], strides = [1, 1]} : vector<16x8xf32> to vector<16x1xf32>
    %120 = vector.extract_strided_slice %117 {offsets = [0, 2], sizes = [16, 1], strides = [1, 1]} : vector<16x8xf32> to vector<16x1xf32>
    %121 = vector.extract_strided_slice %117 {offsets = [0, 3], sizes = [16, 1], strides = [1, 1]} : vector<16x8xf32> to vector<16x1xf32>
    %122 = vector.extract_strided_slice %117 {offsets = [0, 4], sizes = [16, 1], strides = [1, 1]} : vector<16x8xf32> to vector<16x1xf32>
    %123 = vector.extract_strided_slice %117 {offsets = [0, 5], sizes = [16, 1], strides = [1, 1]} : vector<16x8xf32> to vector<16x1xf32>
    %124 = vector.extract_strided_slice %117 {offsets = [0, 6], sizes = [16, 1], strides = [1, 1]} : vector<16x8xf32> to vector<16x1xf32>
    %125 = vector.extract_strided_slice %117 {offsets = [0, 7], sizes = [16, 1], strides = [1, 1]} : vector<16x8xf32> to vector<16x1xf32>
    %126 = tpu.concatenate %118, %119, %120, %121, %122, %123, %124, %125 in 0 : vector<16x1xf32>, vector<16x1xf32>, vector<16x1xf32>, vector<16x1xf32>, vector<16x1xf32>, vector<16x1xf32>, vector<16x1xf32>, vector<16x1xf32> -> vector<128x1xf32>
    %127 = vector.extract_strided_slice %96 {offsets = [0, 24], sizes = [16, 8], strides = [1, 1]} : vector<16x32xf32> to vector<16x8xf32>
    %128 = vector.extract_strided_slice %127 {offsets = [0, 0], sizes = [16, 1], strides = [1, 1]} : vector<16x8xf32> to vector<16x1xf32>
    %129 = vector.extract_strided_slice %127 {offsets = [0, 1], sizes = [16, 1], strides = [1, 1]} : vector<16x8xf32> to vector<16x1xf32>
    %130 = vector.extract_strided_slice %127 {offsets = [0, 2], sizes = [16, 1], strides = [1, 1]} : vector<16x8xf32> to vector<16x1xf32>
    %131 = vector.extract_strided_slice %127 {offsets = [0, 3], sizes = [16, 1], strides = [1, 1]} : vector<16x8xf32> to vector<16x1xf32>
    %132 = vector.extract_strided_slice %127 {offsets = [0, 4], sizes = [16, 1], strides = [1, 1]} : vector<16x8xf32> to vector<16x1xf32>
    %133 = vector.extract_strided_slice %127 {offsets = [0, 5], sizes = [16, 1], strides = [1, 1]} : vector<16x8xf32> to vector<16x1xf32>
    %134 = vector.extract_strided_slice %127 {offsets = [0, 6], sizes = [16, 1], strides = [1, 1]} : vector<16x8xf32> to vector<16x1xf32>
    %135 = vector.extract_strided_slice %127 {offsets = [0, 7], sizes = [16, 1], strides = [1, 1]} : vector<16x8xf32> to vector<16x1xf32>
    %136 = tpu.concatenate %128, %129, %130, %131, %132, %133, %134, %135 in 0 : vector<16x1xf32>, vector<16x1xf32>, vector<16x1xf32>, vector<16x1xf32>, vector<16x1xf32>, vector<16x1xf32>, vector<16x1xf32>, vector<16x1xf32> -> vector<128x1xf32>
    %137 = tpu.concatenate %106, %116, %126, %136 in 1 : vector<128x1xf32>, vector<128x1xf32>, vector<128x1xf32>, vector<128x1xf32> -> vector<128x4xf32>
    %c0_28 = arith.constant 0 : index
    %c0_29 = arith.constant 0 : index
    %138 = vector.load %arg5[%c0_28, %c0_29] : memref<32x128xf32, #tpu.memory_space<vmem>>, vector<32x128xf32>
    %cst_30 = arith.constant dense<0.000000e+00> : vector<32x4xf32>
    %139 = tpu.matmul %138, %137, %cst_30 {dimension_numbers = #tpu.dot_dimension_numbers<[1], [0], [0], [1], [0, 0, 1, 1], [], []>} : vector<32x128xf32>, vector<128x4xf32>, vector<32x4xf32> -> vector<32x4xf32>
    %c0_31 = arith.constant 0 : index
    %c0_32 = arith.constant 0 : index
    %140 = vector.load %arg6[%c0_31, %c0_32] : memref<32x1xf32, #tpu.memory_space<vmem>>, vector<32x1xf32>
    %141 = vector.broadcast %140 : vector<32x1xf32> to vector<32x4xf32>
    %142 = arith.addf %139, %141 : vector<32x4xf32>
    %cst_33 = arith.constant 0.000000e+00 : f32
    %143 = vector.broadcast %cst_33 : f32 to vector<32x4xf32>
    %144 = arith.cmpf oge, %142, %143 : vector<32x4xf32>
    %cst_34 = arith.constant 2.000000e-01 : f32
    %145 = vector.broadcast %cst_34 : f32 to vector<32x4xf32>
    %146 = arith.mulf %142, %145 : vector<32x4xf32>
    %147 = arith.select %144, %142, %146 : vector<32x4xi1>, vector<32x4xf32>
    %c0_35 = arith.constant 0 : index
    %c0_36 = arith.constant 0 : index
    %148 = vector.load %arg7[%c0_35, %c0_36] : memref<32x1xf32, #tpu.memory_space<vmem>>, vector<32x1xf32>
    %149 = vector.broadcast %148 : vector<32x1xf32> to vector<32x4xf32>
    %150 = arith.mulf %147, %149 : vector<32x4xf32>
    %cst_37 = arith.constant dense<0.000000e+00> : vector<4xf32>
    %151 = vector.multi_reduction <add>, %150, %cst_37 [0] : vector<32x4xf32> to vector<4xf32>
    %152 = vector.shape_cast %151 : vector<4xf32> to vector<1x4xf32>
    %c0_38 = arith.constant 0 : index
    %c0_39 = arith.constant 0 : index
    %153 = vector.load %arg8[%c0_38, %c0_39] : memref<1x1xf32, #tpu.memory_space<vmem>>, vector<1x1xf32>
    %154 = vector.broadcast %153 : vector<1x1xf32> to vector<1x4xf32>
    %155 = arith.addf %152, %154 : vector<1x4xf32>
    %c0_40 = arith.constant 0 : index
    %c0_41 = arith.constant 0 : index
    %156 = vector.load %arg9[%c0_40, %c0_41] : memref<1x4xf32, #tpu.memory_space<vmem>>, vector<1x4xf32>
    tpu.vector_store %arg9[%c0_40, %c0_41], %155 {strides = array<i32>} : memref<1x4xf32, #tpu.memory_space<vmem>>, vector<1x4xf32>,
    %c0_42 = arith.constant 0 : index
    %c0_43 = arith.constant 0 : index
    %157 = vector.load %arg10[%c0_42, %c0_43] : memref<32x4xf32, #tpu.memory_space<vmem>>, vector<32x4xf32>
    tpu.vector_store %arg10[%c0_42, %c0_43], %147 {strides = array<i32>} : memref<32x4xf32, #tpu.memory_space<vmem>>, vector<32x4xf32>,
    return
  }
}

</mosaic_0001>

<llo_original>
// kernel: discriminator_forward.1
$region0: #{discriminator_forward.1}
  #allocation0 [shape = 'u32[]', space=smem, size = 0x4, offset = 0x4, fixed_abs, tag = 'smem constant byte address 0x4 - core index']
  #allocation1 [shape = 'u32[144,128]{1,0:T(1,128)}', space=vmem, size = 0x12000, scoped, tag = 'internal scratch']
  #allocation2 [shape = 'f32[1,1]{1,0:T(1,128)S(1)}', space=vmem, size = 0x200, scoped, tag = 'scoped memory for discriminator_forward.1']
  %s0 = inlined_call_operand.vmem [shape: f32[2,32], index: 0, kind: input, shape index: {}]
  %s1 = inlined_call_operand.vmem [shape: f32[16,2], index: 1, kind: input, shape index: {}]
  %s2 = inlined_call_operand.vmem [shape: f32[16,1], index: 2, kind: input, shape index: {}]
  %s3 = inlined_call_operand.vmem [shape: f32[16,51], index: 3, kind: input, shape index: {}]
  %s4 = inlined_call_operand.vmem [shape: f32[16,1], index: 4, kind: input, shape index: {}]
  %s5 = inlined_call_operand.vmem [shape: f32[32,128], index: 5, kind: input, shape index: {}]
  %s6 = inlined_call_operand.vmem [shape: f32[32,1], index: 6, kind: input, shape index: {}]
  %s7 = inlined_call_operand.vmem [shape: f32[32,1], index: 7, kind: input, shape index: {}]
  %s8 = inlined_call_operand.<no memory space> [shape: f32[1,1], index: 8, kind: input, shape index: {}]
  %s9 = inlined_call_operand.hbm [shape: f32[1,4], index: 9, kind: output, shape index: {0}]
  %s10 = inlined_call_operand.vmem [shape: f32[32,4], index: 10, kind: output, shape index: {1}]
  %11 = xla_tuple %s9, %s10
  %s12 = sld [smem:[#allocation0]]
  $region54: #{discriminator_forward.1} parent=0
    _
  %s14 = ssub.s32 1, %s12
  %s15 = scalar_select 0, %s14, %s12
  %v16 = vstv %s8
  %17 = vst [vmem:[#allocation2] sm:$0x1] %v16
  $region1: #{discriminator_forward.1} parent=0
    #allocation3 [shape = 'u8[512]{0}', space=vmem, size = 0x400, scoped, tag = 'output window, operand 0, single buffered']
    #allocation4 [shape = 's32[1]{0}', space=sflag, size = 0x4, scoped, tag = 'scoped memory for discriminator_forward.1']
    %18 = vsyncpa [#allocation4], 0
    // Predicated region
    $region2: #{discriminator_forward.1} parent=1 // pred_check
      _
    $region3: #{discriminator_forward.1} parent=1 // pred_check_branch
      %20 = sbr.rel (0) target = $region5
    $region4: #{discriminator_forward.1} parent=1 // pred_region
      _
    $region5: #{discriminator_forward.1} parent=1 // pred_fallthru
      _
    // Predicated region
    $region6: #{discriminator_forward.1} parent=1 // pred_check
      _
    $region7: #{discriminator_forward.1} parent=1 // pred_check_branch
      %22 = sbr.rel (0) target = $region9
    $region8: #{discriminator_forward.1} parent=1 // pred_region
      _
    $region9: #{discriminator_forward.1} parent=1 // pred_fallthru
      _
    // Predicated region
    $region10: #{discriminator_forward.1} parent=1 // pred_check
      _
    $region11: #{discriminator_forward.1} parent=1 // pred_check_branch
      %24 = sbr.rel (0) target = $region13
    $region12: #{discriminator_forward.1} parent=1 // pred_region
      _
    $region13: #{discriminator_forward.1} parent=1 // pred_fallthru
      _
    // Predicated region
    $region14: #{discriminator_forward.1} parent=1 // pred_check
      _
    $region15: #{discriminator_forward.1} parent=1 // pred_check_branch
      %26 = sbr.rel (0) target = $region17
    $region16: #{discriminator_forward.1} parent=1 // pred_region
      _
    $region17: #{discriminator_forward.1} parent=1 // pred_fallthru
      _
    // Predicated region
    $region18: #{discriminator_forward.1} parent=1 // pred_check
      _
    $region19: #{discriminator_forward.1} parent=1 // pred_check_branch
      %28 = sbr.rel (0) target = $region21
    $region20: #{discriminator_forward.1} parent=1 // pred_region
      _
    $region21: #{discriminator_forward.1} parent=1 // pred_fallthru
      _
    // Predicated region
    $region22: #{discriminator_forward.1} parent=1 // pred_check
      _
    $region23: #{discriminator_forward.1} parent=1 // pred_check_branch
      %30 = sbr.rel (0) target = $region25
    $region24: #{discriminator_forward.1} parent=1 // pred_region
      _
    $region25: #{discriminator_forward.1} parent=1 // pred_fallthru
      _
    // Predicated region
    $region26: #{discriminator_forward.1} parent=1 // pred_check
      _
    $region27: #{discriminator_forward.1} parent=1 // pred_check_branch
      %32 = sbr.rel (0) target = $region29
    $region28: #{discriminator_forward.1} parent=1 // pred_region
      _
    $region29: #{discriminator_forward.1} parent=1 // pred_fallthru
      _
    // Predicated region
    $region30: #{discriminator_forward.1} parent=1 // pred_check
      _
    $region31: #{discriminator_forward.1} parent=1 // pred_check_branch
      %34 = sbr.rel (0) target = $region33
    $region32: #{discriminator_forward.1} parent=1 // pred_region
      _
    $region33: #{discriminator_forward.1} parent=1 // pred_fallthru
      _
    // Predicated region
    $region34: #{discriminator_forward.1} parent=1 // pred_check
      _
    $region35: #{discriminator_forward.1} parent=1 // pred_check_branch
      %36 = sbr.rel (0) target = $region37
    $region36: #{discriminator_forward.1} parent=1 // pred_region
      _
    $region37: #{discriminator_forward.1} parent=1 // pred_fallthru
      _
    %v37 = vld [vmem:[%s0] sm:$0x3]
    %v38 = vld [vmem:[%s1] sm:$0xff]
    %v39 = vld [vmem:[%s1 + $0x8] sm:$0xff]
    %41 = vset.pattern.permute.xlu0 0
    %42 = vperm.xlu0 %41, %v38
    %v43 = vpop.permute.xlu0 %42
    %46 = vset.pattern.permute.xlu0 0
    %47 = vperm.xlu0 %46, %v39
    %v48 = vpop.permute.xlu0 %47
    %v50 = vlaneseq
    %v51 = vshrl.u32 %v50, 7
    %v52 = vsub.s32 0, %v51
    %v53 = vrot.slane %v37, %v52
    %v54 = vmul.f32 %v43, %v53
    %v55 = vmul.f32 %v48, %v53
    %56 = vset.pattern.permute.xlu0 1
    %57 = vperm.xlu0 %56, %v38
    %v58 = vpop.permute.xlu0 %57
    %60 = vset.pattern.permute.xlu0 1
    %61 = vperm.xlu0 %60, %v39
    %v62 = vpop.permute.xlu0 %61
    %v64 = vlaneseq
    %v65 = vshrl.u32 %v64, 7
    %v66 = vsub.s32 1, %v65
    %v67 = vrot.slane %v37, %v66
    %v68 = vmul.f32 %v58, %v67
    %v69 = vmul.f32 %v62, %v67
    %v70 = vadd.f32 %v54, %v68
    %v71 = vadd.f32 %v55, %v69
    %v72 = vld [vmem:[%s2] sm:$0xff]
    %v73 = vld [vmem:[%s2 + $0x8] sm:$0xff]
    %75 = vset.pattern.permute.xlu0 0
    %76 = vperm.xlu0 %75, %v72
    %v77 = vpop.permute.xlu0 %76
    %80 = vset.pattern.permute.xlu0 0
    %81 = vperm.xlu0 %80, %v73
    %v82 = vpop.permute.xlu0 %81
    %v84 = vadd.f32 %v70, %v77
    %v85 = vadd.f32 %v71, %v82
    %vm86 = vcmp.ge.f32.partialorder %v84, 0.0
    %vm87 = vcmp.ge.f32.partialorder %v85, 0.0
    %v88 = vmul.f32 %v84, 0.2
    %v89 = vmul.f32 %v85, 0.2
    %v90 = vsel %vm86, %v84, %v88
    %v91 = vsel %vm87, %v85, %v89
    %94 = vrot.lane.b32.xlu0 %v90, 120
    %v95 = vpop.permute.xlu0 %94
    %96 = vrot.lane.b32.xlu0 %v91, 120
    %v97 = vpop.permute.xlu0 %96
    %v100 = vadd.f32 %v90, %v95
    %v101 = vadd.f32 %v91, %v97
    %102 = vrot.lane.b32.xlu0 %v90, 112
    %v103 = vpop.permute.xlu0 %102
    %104 = vrot.lane.b32.xlu0 %v91, 112
    %v105 = vpop.permute.xlu0 %104
    %v108 = vadd.f32 %v100, %v103
    %v109 = vadd.f32 %v101, %v105
    %110 = vrot.lane.b32.xlu0 %v90, 104
    %v111 = vpop.permute.xlu0 %110
    %112 = vrot.lane.b32.xlu0 %v91, 104
    %v113 = vpop.permute.xlu0 %112
    %v116 = vadd.f32 %v108, %v111
    %v117 = vadd.f32 %v109, %v113
    %v118 = vmul.f32 %v116, 0.25
    %v119 = vmul.f32 %v117, 0.25
    %v120 = vsub.f32 %v90, %v118
    %v121 = vsub.f32 %v91, %v119
    %v122 = vmul.f32 %v120, %v120
    %v123 = vmul.f32 %v121, %v121
    %126 = vrot.lane.b32.xlu0 %v118, 8
    %v127 = vpop.permute.xlu0 %126
    %128 = vrot.lane.b32.xlu0 %v119, 8
    %v129 = vpop.permute.xlu0 %128
    %v132 = vsub.f32 %v90, %v127
    %v133 = vsub.f32 %v91, %v129
    %v134 = vmul.f32 %v132, %v132
    %v135 = vmul.f32 %v133, %v133
    %138 = vrot.lane.b32.xlu0 %v134, 120
    %v139 = vpop.permute.xlu0 %138
    %140 = vrot.lane.b32.xlu0 %v135, 120
    %v141 = vpop.permute.xlu0 %140
    %v144 = vadd.f32 %v122, %v139
    %v145 = vadd.f32 %v123, %v141
    %146 = vrot.lane.b32.xlu0 %v118, 16
    %v147 = vpop.permute.xlu0 %146
    %148 = vrot.lane.b32.xlu0 %v119, 16
    %v149 = vpop.permute.xlu0 %148
    %v152 = vsub.f32 %v90, %v147
    %v153 = vsub.f32 %v91, %v149
    %v154 = vmul.f32 %v152, %v152
    %v155 = vmul.f32 %v153, %v153
    %158 = vrot.lane.b32.xlu0 %v154, 112
    %v159 = vpop.permute.xlu0 %158
    %160 = vrot.lane.b32.xlu0 %v155, 112
    %v161 = vpop.permute.xlu0 %160
    %v164 = vadd.f32 %v144, %v159
    %v165 = vadd.f32 %v145, %v161
    %166 = vrot.lane.b32.xlu0 %v118, 24
    %v167 = vpop.permute.xlu0 %166
    %168 = vrot.lane.b32.xlu0 %v119, 24
    %v169 = vpop.permute.xlu0 %168
    %v172 = vsub.f32 %v90, %v167
    %v173 = vsub.f32 %v91, %v169
    %v174 = vmul.f32 %v172, %v172
    %v175 = vmul.f32 %v173, %v173
    %178 = vrot.lane.b32.xlu0 %v174, 104
    %v179 = vpop.permute.xlu0 %178
    %180 = vrot.lane.b32.xlu0 %v175, 104
    %v181 = vpop.permute.xlu0 %180
    %v184 = vadd.f32 %v164, %v179
    %v185 = vadd.f32 %v165, %v181
    %v186 = vmul.f32 %v184, 0.25
    %v187 = vmul.f32 %v185, 0.25
    %v188 = vadd.f32 %v186, 1e-08
    %v189 = vadd.f32 %v187, 1e-08
    %v190 = vrsqrt.pop %v188
    %v191 = vmul.f32 %v188, %v190
    %vm192 = vcmp.eq.f32.partialorder %v188, inf
    %v193 = vsel %vm192, %v188, %v191
    %vm194 = vcmp.eq.f32.partialorder %v188, 0.0
    %v195 = vand.u32 %v188, 2147483648
    %v196 = vsel %vm194, %v195, %v193
    %v197 = vrsqrt.pop %v189
    %v198 = vmul.f32 %v189, %v197
    %vm199 = vcmp.eq.f32.partialorder %v189, inf
    %v200 = vsel %vm199, %v189, %v198
    %vm201 = vcmp.eq.f32.partialorder %v189, 0.0
    %v202 = vand.u32 %v189, 2147483648
    %v203 = vsel %vm201, %v202, %v200
    %vm204 = vcmask 64512
    %v205 = vsel %vm204, %v196, 0.0
    %206 = vadd.xlane.f32.xlu0 %v205
    %v207 = vpop.xlane.xlu0 %206
    %v208 = vsel %vm204, %v203, 0.0
    %209 = vadd.xlane.f32.xlu0 %v208
    %v210 = vpop.xlane.xlu0 %209
    %v211 = vrcp.pop 8.0
    %v212 = vmul.f32 %v207, %v211
    %v213 = vmul.f32 %v210, %v211
    %v214 = vadd.f32 %v212, %v213
    %v215 = vrot.slane %v214, 4
    %v216 = vadd.f32 %v214, %v215
    %v217 = vrot.slane %v216, 2
    %v218 = vadd.f32 %v216, %v217
    %v219 = vrot.slane %v218, 1
    %v220 = vadd.f32 %v218, %v219
    %v221 = vrcp.pop 16.0
    %v222 = vmul.f32 %v220, %v221
    %v223 = vlaneseq
    %v224 = vand.u32 %v223, 127
    %vm225 = vcmp.lt.s32.totalorder %v224, 0
    %v226 = vsub.s32 0, %v224
    %v227 = vsel %vm225, %v226, %v224
    %v228 = vshrl.u32 %v227, 3
    %v229 = vand.u32 %v227, 7
    %v230 = vsub.s32 0, %v229
    %v231 = vsel %vm225, %v230, %v229
    %vm232 = vcmp.ne.s32.totalorder %v231, 0
    %vm233 = vcmp.lt.s32.totalorder %v231, 0
    %vm234 = vmand %vm233, %vm232
    %v235 = vadd.s32 %v231, 8
    %v236 = vsel %vm234, %v235, %v231
    %238 = vrot.lane.b32.xlu0 %v90, 1
    %v239 = vpop.permute.xlu0 %238
    %240 = vrot.lane.b32.xlu0 %v91, 1
    %v241 = vpop.permute.xlu0 %240
    %242 = vrot.lane.b32.xlu0 %v222, 1
    %v243 = vpop.permute.xlu0 %242
    %vm247 = vcmask 7168
    %v248 = vsel %vm247, 0.0, %v239
    %v249 = vsel %vm247, 0.0, %v241
    %v250 = vsel %vm247, 0.0, %v243
    %vm251 = vcmp.eq.s32.totalorder %v236, 0
    %v252 = vsel %vm251, 0.0, %v248
    %v253 = vsel %vm251, 0.0, %v249
    %v254 = vsel %vm251, 0.0, %v250
    %255 = vrot.lane.b32.xlu0 %v90, 127
    %v256 = vpop.permute.xlu0 %255
    %257 = vrot.lane.b32.xlu0 %v91, 127
    %v258 = vpop.permute.xlu0 %257
    %259 = vrot.lane.b32.xlu0 %v222, 127
    %v260 = vpop.permute.xlu0 %259
    %vm264 = vcmask 252928
    %v265 = vsel %vm264, %v256, 0.0
    %v266 = vsel %vm264, %v258, 0.0
    %v267 = vsel %vm264, %v260, 0.0
    %vm268 = vcmp.eq.s32.totalorder %v236, 7
    %v269 = vsel %vm268, 0.0, %v265
    %v270 = vsel %vm268, 0.0, %v266
    %v271 = vsel %vm268, 0.0, %v267
    %vm272 = vcmask 1040384
    %v273 = vrot.slane %v90, 7
    %v274 = vrot.slane %v91, 7
    %v275 = vsel %vm272, %v273, %v274
    %v276 = vrot.slane %v222, 7
    %v277 = vsel %vm272, %v274, %v276
    %vm284 = vcmask 1041408
    %v285 = vrot.slane %v269, 6
    %v286 = vrot.slane %v270, 6
    %v287 = vsel %vm284, %v285, %v286
    %v288 = vrot.slane %v271, 6
    %v289 = vsel %vm284, %v286, %v288
    %v292 = vsel %vm272, %v254, %v273
    %v293 = vsel %vm284, %v277, %v285
    %v294 = vld [vmem:[%s3] sm:$0xff]
    %v295 = vld [vmem:[%s3 + $0x8] sm:$0xff]
    %v296 = vld [vmem:[%s4] sm:$0xff]
    %v297 = vld [vmem:[%s4 + $0x8] sm:$0xff]
    %299 = vset.pattern.permute.xlu0 0
    %300 = vperm.xlu0 %299, %v296
    %v301 = vpop.permute.xlu0 %300
    %304 = vset.pattern.permute.xlu0 0
    %305 = vperm.xlu0 %304, %v297
    %v306 = vpop.permute.xlu0 %305
    %vm308 = vcmask 416768
    %v310 = vsel %vm308, %v294, 0
    %v313 = vsel %vm308, %v295, 0
    %vm315 = vcmask 1042432
    %v316 = vsel %vm315, %v289, 0
    %318 = vmatprep.subr.mxu0 0.0
    %319 = vmatpush1.msra.mxu0 %v252
    %320 = vmatprep.subr.mxu0 0.0
    %321 = vmatpush1.msra.mxu0 %v253
    %322 = vmatprep.subr.mxu0 0.0
    %323 = vmatpush1.msra.mxu0 %v292
    %324 = vmatprep.subr.mxu0 0.0
    %325 = vmatpush1.msra.mxu0 %v275
    %326 = vmatprep.subr.mxu0 0.0
    %327 = vmatpush1.msra.mxu0 %v293
    %328 = vmatprep.subr.mxu0 0.0
    %329 = vmatpush1.msra.mxu0 %v287
    %330 = vmatprep.subr.mxu0 0.0
    %331 = vmatpush1.msra.mxu0 %v316
    %332 = vmatprep.subr.mxu0 0.0
    %333 = vmatpush1.msra.mxu0 0.0
    %334 = vmatprep.subr.mxu0 0.0
    %335 = vmatpush1.msra.mxu0 0.0
    %336 = vmatprep.subr.mxu0 0.0
    %337 = vmatpush1.msra.mxu0 0.0
    %338 = vmatprep.subr.mxu0 0.0
    %339 = vmatpush1.msra.mxu0 0.0
    %340 = vmatprep.subr.mxu0 0.0
    %341 = vmatpush1.msra.mxu0 0.0
    %342 = vmatprep.subr.mxu0 0.0
    %343 = vmatpush1.msra.mxu0 0.0
    %344 = vmatprep.subr.mxu0 0.0
    %345 = vmatpush1.msra.mxu0 0.0
    %346 = vmatprep.subr.mxu0 0.0
    %347 = vmatpush1.msra.mxu0 0.0
    %348 = vmatprep.subr.mxu0 0.0
    %349 = vmatpush1.msra.mxu0 0.0
    %350 = vmatprep.subr.mxu0 0.0
    %351 = vmatpush1.msra.mxu0 0.0
    %352 = vmatprep.subr.mxu0 0.0
    %353 = vmatpush1.msra.mxu0 0.0
    %354 = vmatprep.subr.mxu0 0.0
    %355 = vmatpush1.msra.mxu0 0.0
    %356 = vmatprep.subr.mxu0 0.0
    %357 = vmatpush1.msra.mxu0 0.0
    %358 = vmatprep.subr.mxu0 0.0
    %359 = vmatpush1.msra.mxu0 0.0
    %360 = vmatprep.subr.mxu0 0.0
    %361 = vmatpush1.msra.mxu0 0.0
    %362 = vmatprep.subr.mxu0 0.0
    %363 = vmatpush1.msra.mxu0 0.0
    %364 = vmatprep.subr.mxu0 0.0
    %365 = vmatpush1.msra.mxu0 0.0
    %366 = vmatprep.subr.mxu0 0.0
    %367 = vmatpush1.msra.mxu0 0.0
    %368 = vmatprep.subr.mxu0 0.0
    %369 = vmatpush1.msra.mxu0 0.0
    %370 = vmatprep.subr.mxu0 0.0
    %371 = vmatpush1.msra.mxu0 0.0
    %372 = vmatprep.subr.mxu0 0.0
    %373 = vmatpush1.msra.mxu0 0.0
    %374 = vmatprep.subr.mxu0 0.0
    %375 = vmatpush1.msra.mxu0 0.0
    %376 = vmatprep.subr.mxu0 0.0
    %377 = vmatpush1.msra.mxu0 0.0
    %378 = vmatprep.subr.mxu0 0.0
    %379 = vmatpush1.msra.mxu0 0.0
    %380 = vmatprep.subr.mxu0 0.0
    %381 = vmatpush1.msra.mxu0 0.0
    %382 = vmatprep.mubr.f32.mxu0 0.0
    %383 = vmatmul.mubr.f32.gmra.mrb[0].mxu0 %v310
    %v384 = vpop.f32.mrb[0].mxu0
    %v385 = vadd.f32 %v301, %v384
    %v386 = vpop.f32.mrb[0].mxu0
    %387 = vmatprep.mubr.f32.mxu0 0.0
    %388 = vmatmul.mubr.f32.gmra.mrb[0].mxu0 %v313
    %v389 = vpop.f32.mrb[0].mxu0
    %v390 = vadd.f32 %v306, %v389
    %v391 = vpop.f32.mrb[0].mxu0
    %392 = vdwg.mxu0
    %vm393 = vcmp.ge.f32.partialorder %v385, 0.0
    %vm394 = vcmp.ge.f32.partialorder %v390, 0.0
    %v395 = vmul.f32 %v385, 0.2
    %v396 = vmul.f32 %v390, 0.2
    %v397 = vsel %vm393, %v385, %v395
    %v398 = vsel %vm394, %v390, %v396
    %401 = vrot.lane.b32.xlu0 %v397, 127
    %v402 = vpop.permute.xlu0 %401
    %403 = vrot.lane.b32.xlu0 %v398, 127
    %v404 = vpop.permute.xlu0 %403
    %407 = vrot.lane.b32.xlu0 %v397, 126
    %v408 = vpop.permute.xlu0 %407
    %409 = vrot.lane.b32.xlu0 %v398, 126
    %v410 = vpop.permute.xlu0 %409
    %413 = vrot.lane.b32.xlu0 %v397, 125
    %v414 = vpop.permute.xlu0 %413
    %415 = vrot.lane.b32.xlu0 %v398, 125
    %v416 = vpop.permute.xlu0 %415
    %419 = vrot.lane.b32.xlu0 %v397, 124
    %v420 = vpop.permute.xlu0 %419
    %421 = vrot.lane.b32.xlu0 %v398, 124
    %v422 = vpop.permute.xlu0 %421
    %425 = vrot.lane.b32.xlu0 %v397, 123
    %v426 = vpop.permute.xlu0 %425
    %427 = vrot.lane.b32.xlu0 %v398, 123
    %v428 = vpop.permute.xlu0 %427
    %431 = vrot.lane.b32.xlu0 %v397, 122
    %v432 = vpop.permute.xlu0 %431
    %433 = vrot.lane.b32.xlu0 %v398, 122
    %v434 = vpop.permute.xlu0 %433
    %437 = vrot.lane.b32.xlu0 %v397, 121
    %v438 = vpop.permute.xlu0 %437
    %439 = vrot.lane.b32.xlu0 %v398, 121
    %v440 = vpop.permute.xlu0 %439
    %443 = vrot.lane.b32.xlu0 %v402, 121
    %v444 = vpop.permute.xlu0 %443
    %445 = vrot.lane.b32.xlu0 %v404, 121
    %v446 = vpop.permute.xlu0 %445
    %447 = vrot.lane.b32.xlu0 %v408, 121
    %v448 = vpop.permute.xlu0 %447
    %449 = vrot.lane.b32.xlu0 %v410, 121
    %v450 = vpop.permute.xlu0 %449
    %451 = vrot.lane.b32.xlu0 %v414, 121
    %v452 = vpop.permute.xlu0 %451
    %453 = vrot.lane.b32.xlu0 %v416, 121
    %v454 = vpop.permute.xlu0 %453
    %455 = vrot.lane.b32.xlu0 %v420, 121
    %v456 = vpop.permute.xlu0 %455
    %457 = vrot.lane.b32.xlu0 %v422, 121
    %v458 = vpop.permute.xlu0 %457
    %459 = vrot.lane.b32.xlu0 %v426, 121
    %v460 = vpop.permute.xlu0 %459
    %461 = vrot.lane.b32.xlu0 %v428, 121
    %v462 = vpop.permute.xlu0 %461
    %463 = vrot.lane.b32.xlu0 %v432, 121
    %v464 = vpop.permute.xlu0 %463
    %465 = vrot.lane.b32.xlu0 %v434, 121
    %v466 = vpop.permute.xlu0 %465
    %467 = vrot.lane.b32.xlu0 %v438, 121
    %v468 = vpop.permute.xlu0 %467
    %469 = vrot.lane.b32.xlu0 %v440, 121
    %v470 = vpop.permute.xlu0 %469
    %485 = vrot.lane.b32.xlu0 %v397, 114
    %v486 = vpop.permute.xlu0 %485
    %487 = vrot.lane.b32.xlu0 %v398, 114
    %v488 = vpop.permute.xlu0 %487
    %489 = vrot.lane.b32.xlu0 %v402, 114
    %v490 = vpop.permute.xlu0 %489
    %491 = vrot.lane.b32.xlu0 %v404, 114
    %v492 = vpop.permute.xlu0 %491
    %493 = vrot.lane.b32.xlu0 %v408, 114
    %v494 = vpop.permute.xlu0 %493
    %495 = vrot.lane.b32.xlu0 %v410, 114
    %v496 = vpop.permute.xlu0 %495
    %497 = vrot.lane.b32.xlu0 %v414, 114
    %v498 = vpop.permute.xlu0 %497
    %499 = vrot.lane.b32.xlu0 %v416, 114
    %v500 = vpop.permute.xlu0 %499
    %501 = vrot.lane.b32.xlu0 %v420, 114
    %v502 = vpop.permute.xlu0 %501
    %503 = vrot.lane.b32.xlu0 %v422, 114
    %v504 = vpop.permute.xlu0 %503
    %505 = vrot.lane.b32.xlu0 %v426, 114
    %v506 = vpop.permute.xlu0 %505
    %507 = vrot.lane.b32.xlu0 %v428, 114
    %v508 = vpop.permute.xlu0 %507
    %509 = vrot.lane.b32.xlu0 %v432, 114
    %v510 = vpop.permute.xlu0 %509
    %511 = vrot.lane.b32.xlu0 %v434, 114
    %v512 = vpop.permute.xlu0 %511
    %513 = vrot.lane.b32.xlu0 %v438, 114
    %v514 = vpop.permute.xlu0 %513
    %515 = vrot.lane.b32.xlu0 %v440, 114
    %v516 = vpop.permute.xlu0 %515
    %533 = vrot.lane.b32.xlu0 %v397, 107
    %v534 = vpop.permute.xlu0 %533
    %535 = vrot.lane.b32.xlu0 %v398, 107
    %v536 = vpop.permute.xlu0 %535
    %537 = vrot.lane.b32.xlu0 %v402, 107
    %v538 = vpop.permute.xlu0 %537
    %539 = vrot.lane.b32.xlu0 %v404, 107
    %v540 = vpop.permute.xlu0 %539
    %541 = vrot.lane.b32.xlu0 %v408, 107
    %v542 = vpop.permute.xlu0 %541
    %543 = vrot.lane.b32.xlu0 %v410, 107
    %v544 = vpop.permute.xlu0 %543
    %545 = vrot.lane.b32.xlu0 %v414, 107
    %v546 = vpop.permute.xlu0 %545
    %547 = vrot.lane.b32.xlu0 %v416, 107
    %v548 = vpop.permute.xlu0 %547
    %549 = vrot.lane.b32.xlu0 %v420, 107
    %v550 = vpop.permute.xlu0 %549
    %551 = vrot.lane.b32.xlu0 %v422, 107
    %v552 = vpop.permute.xlu0 %551
    %553 = vrot.lane.b32.xlu0 %v426, 107
    %v554 = vpop.permute.xlu0 %553
    %555 = vrot.lane.b32.xlu0 %v428, 107
    %v556 = vpop.permute.xlu0 %555
    %557 = vrot.lane.b32.xlu0 %v432, 107
    %v558 = vpop.permute.xlu0 %557
    %559 = vrot.lane.b32.xlu0 %v434, 107
    %v560 = vpop.permute.xlu0 %559
    %561 = vrot.lane.b32.xlu0 %v438, 107
    %v562 = vpop.permute.xlu0 %561
    %563 = vrot.lane.b32.xlu0 %v440, 107
    %v564 = vpop.permute.xlu0 %563
    %v581 = vsel %vm247, %v397, %v438
    %v582 = vsel %vm247, %v398, %v440
    %v583 = vsel %vm247, %v402, %v444
    %v584 = vsel %vm247, %v404, %v446
    %v585 = vsel %vm247, %v408, %v448
    %v586 = vsel %vm247, %v410, %v450
    %v587 = vsel %vm247, %v414, %v452
    %v588 = vsel %vm247, %v416, %v454
    %v589 = vsel %vm247, %v420, %v456
    %v590 = vsel %vm247, %v422, %v458
    %v591 = vsel %vm247, %v426, %v460
    %v592 = vsel %vm247, %v428, %v462
    %v593 = vsel %vm247, %v432, %v464
    %v594 = vsel %vm247, %v434, %v466
    %v595 = vsel %vm247, %v438, %v468
    %v596 = vsel %vm247, %v440, %v470
    %vm597 = vcmask 15360
    %v598 = vsel %vm597, %v581, %v486
    %v599 = vsel %vm597, %v582, %v488
    %v600 = vsel %vm597, %v583, %v490
    %v601 = vsel %vm597, %v584, %v492
    %v602 = vsel %vm597, %v585, %v494
    %v603 = vsel %vm597, %v586, %v496
    %v604 = vsel %vm597, %v587, %v498
    %v605 = vsel %vm597, %v588, %v500
    %v606 = vsel %vm597, %v589, %v502
    %v607 = vsel %vm597, %v590, %v504
    %v608 = vsel %vm597, %v591, %v506
    %v609 = vsel %vm597, %v592, %v508
    %v610 = vsel %vm597, %v593, %v510
    %v611 = vsel %vm597, %v594, %v512
    %v612 = vsel %vm597, %v595, %v514
    %v613 = vsel %vm597, %v596, %v516
    %vm614 = vcmask 23552
    %v615 = vsel %vm614, %v598, %v534
    %v616 = vsel %vm614, %v599, %v536
    %v617 = vsel %vm614, %v600, %v538
    %v618 = vsel %vm614, %v601, %v540
    %v619 = vsel %vm614, %v602, %v542
    %v620 = vsel %vm614, %v603, %v544
    %v621 = vsel %vm614, %v604, %v546
    %v622 = vsel %vm614, %v605, %v548
    %v623 = vsel %vm614, %v606, %v550
    %v624 = vsel %vm614, %v607, %v552
    %v625 = vsel %vm614, %v608, %v554
    %v626 = vsel %vm614, %v609, %v556
    %v627 = vsel %vm614, %v610, %v558
    %v628 = vsel %vm614, %v611, %v560
    %v629 = vsel %vm614, %v612, %v562
    %v630 = vsel %vm614, %v613, %v564
    %v631 = vld [vmem:[%s5] sm:$0xff]
    %v632 = vld [vmem:[%s5 + $0x8] sm:$0xff]
    %v633 = vld [vmem:[%s5 + $0x10] sm:$0xff]
    %v634 = vld [vmem:[%s5 + $0x18] sm:$0xff]
    %v635 = vld [vmem:[%s6] sm:$0xff]
    %v636 = vld [vmem:[%s6 + $0x8] sm:$0xff]
    %v637 = vld [vmem:[%s6 + $0x10] sm:$0xff]
    %v638 = vld [vmem:[%s6 + $0x18] sm:$0xff]
    %640 = vset.pattern.permute.xlu0 0
    %641 = vperm.xlu0 %640, %v635
    %v642 = vpop.permute.xlu0 %641
    %645 = vset.pattern.permute.xlu0 0
    %646 = vperm.xlu0 %645, %v636
    %v647 = vpop.permute.xlu0 %646
    %650 = vset.pattern.permute.xlu0 0
    %651 = vperm.xlu0 %650, %v637
    %v652 = vpop.permute.xlu0 %651
    %655 = vset.pattern.permute.xlu0 0
    %656 = vperm.xlu0 %655, %v638
    %v657 = vpop.permute.xlu0 %656
    %659 = vmatprep.subr.mxu0 0.0
    %660 = vmatpush1.msra.mxu0 %v615
    %661 = vmatprep.subr.mxu0 0.0
    %662 = vmatpush1.msra.mxu0 %v616
    %663 = vmatprep.subr.mxu0 0.0
    %664 = vmatpush1.msra.mxu0 %v617
    %665 = vmatprep.subr.mxu0 0.0
    %666 = vmatpush1.msra.mxu0 %v618
    %667 = vmatprep.subr.mxu0 0.0
    %668 = vmatpush1.msra.mxu0 %v619
    %669 = vmatprep.subr.mxu0 0.0
    %670 = vmatpush1.msra.mxu0 %v620
    %671 = vmatprep.subr.mxu0 0.0
    %672 = vmatpush1.msra.mxu0 %v621
    %673 = vmatprep.subr.mxu0 0.0
    %674 = vmatpush1.msra.mxu0 %v622
    %675 = vmatprep.subr.mxu0 0.0
    %676 = vmatpush1.msra.mxu0 %v623
    %677 = vmatprep.subr.mxu0 0.0
    %678 = vmatpush1.msra.mxu0 %v624
    %679 = vmatprep.subr.mxu0 0.0
    %680 = vmatpush1.msra.mxu0 %v625
    %681 = vmatprep.subr.mxu0 0.0
    %682 = vmatpush1.msra.mxu0 %v626
    %683 = vmatprep.subr.mxu0 0.0
    %684 = vmatpush1.msra.mxu0 %v627
    %685 = vmatprep.subr.mxu0 0.0
    %686 = vmatpush1.msra.mxu0 %v628
    %687 = vmatprep.subr.mxu0 0.0
    %688 = vmatpush1.msra.mxu0 %v629
    %689 = vmatprep.subr.mxu0 0.0
    %690 = vmatpush1.msra.mxu0 %v630
    %691 = vmatprep.subr.mxu0 0.0
    %692 = vmatpush1.msra.mxu0 0.0
    %693 = vmatprep.subr.mxu0 0.0
    %694 = vmatpush1.msra.mxu0 0.0
    %695 = vmatprep.subr.mxu0 0.0
    %696 = vmatpush1.msra.mxu0 0.0
    %697 = vmatprep.subr.mxu0 0.0
    %698 = vmatpush1.msra.mxu0 0.0
    %699 = vmatprep.subr.mxu0 0.0
    %700 = vmatpush1.msra.mxu0 0.0
    %701 = vmatprep.subr.mxu0 0.0
    %702 = vmatpush1.msra.mxu0 0.0
    %703 = vmatprep.subr.mxu0 0.0
    %704 = vmatpush1.msra.mxu0 0.0
    %705 = vmatprep.subr.mxu0 0.0
    %706 = vmatpush1.msra.mxu0 0.0
    %707 = vmatprep.subr.mxu0 0.0
    %708 = vmatpush1.msra.mxu0 0.0
    %709 = vmatprep.subr.mxu0 0.0
    %710 = vmatpush1.msra.mxu0 0.0
    %711 = vmatprep.subr.mxu0 0.0
    %712 = vmatpush1.msra.mxu0 0.0
    %713 = vmatprep.subr.mxu0 0.0
    %714 = vmatpush1.msra.mxu0 0.0
    %715 = vmatprep.subr.mxu0 0.0
    %716 = vmatpush1.msra.mxu0 0.0
    %717 = vmatprep.subr.mxu0 0.0
    %718 = vmatpush1.msra.mxu0 0.0
    %719 = vmatprep.subr.mxu0 0.0
    %720 = vmatpush1.msra.mxu0 0.0
    %721 = vmatprep.subr.mxu0 0.0
    %722 = vmatpush1.msra.mxu0 0.0
    %723 = vmatprep.mubr.f32.mxu0 0.0
    %724 = vmatmul.mubr.f32.gmra.mrb[0].mxu0 %v631
    %v725 = vpop.f32.mrb[0].mxu0
    %v726 = vadd.f32 %v642, %v725
    %v727 = vpop.f32.mrb[0].mxu0
    %728 = vmatprep.mubr.f32.mxu0 0.0
    %729 = vmatmul.mubr.f32.gmra.mrb[0].mxu0 %v632
    %v730 = vpop.f32.mrb[0].mxu0
    %v731 = vadd.f32 %v647, %v730
    %v732 = vpop.f32.mrb[0].mxu0
    %733 = vmatprep.mubr.f32.mxu0 0.0
    %734 = vmatmul.mubr.f32.gmra.mrb[0].mxu0 %v633
    %v735 = vpop.f32.mrb[0].mxu0
    %v736 = vadd.f32 %v652, %v735
    %v737 = vpop.f32.mrb[0].mxu0
    %738 = vmatprep.mubr.f32.mxu0 0.0
    %739 = vmatmul.mubr.f32.gmra.mrb[0].mxu0 %v634
    %v740 = vpop.f32.mrb[0].mxu0
    %v741 = vadd.f32 %v657, %v740
    %v742 = vpop.f32.mrb[0].mxu0
    %743 = vdwg.mxu0
    %vm744 = vcmp.ge.f32.partialorder %v726, 0.0
    %vm745 = vcmp.ge.f32.partialorder %v731, 0.0
    %vm746 = vcmp.ge.f32.partialorder %v736, 0.0
    %vm747 = vcmp.ge.f32.partialorder %v741, 0.0
    %v748 = vmul.f32 %v726, 0.2
    %v749 = vmul.f32 %v731, 0.2
    %v750 = vmul.f32 %v736, 0.2
    %v751 = vmul.f32 %v741, 0.2
    %v752 = vsel %vm744, %v726, %v748
    %v753 = vsel %vm745, %v731, %v749
    %v754 = vsel %vm746, %v736, %v750
    %v755 = vsel %vm747, %v741, %v751
    %v756 = vld [vmem:[%s7] sm:$0xff]
    %v757 = vld [vmem:[%s7 + $0x8] sm:$0xff]
    %v758 = vld [vmem:[%s7 + $0x10] sm:$0xff]
    %v759 = vld [vmem:[%s7 + $0x18] sm:$0xff]
    %761 = vset.pattern.permute.xlu0 0
    %762 = vperm.xlu0 %761, %v756
    %v763 = vpop.permute.xlu0 %762
    %766 = vset.pattern.permute.xlu0 0
    %767 = vperm.xlu0 %766, %v757
    %v768 = vpop.permute.xlu0 %767
    %771 = vset.pattern.permute.xlu0 0
    %772 = vperm.xlu0 %771, %v758
    %v773 = vpop.permute.xlu0 %772
    %776 = vset.pattern.permute.xlu0 0
    %777 = vperm.xlu0 %776, %v759
    %v778 = vpop.permute.xlu0 %777
    %v780 = vmul.f32 %v752, %v763
    %v781 = vmul.f32 %v753, %v768
    %v782 = vmul.f32 %v754, %v773
    %v783 = vmul.f32 %v755, %v778
    %vm784 = vcmask 31744
    %v785 = vsel %vm784, %v780, 0.0
    %v786 = vsel %vm784, %v781, 0.0
    %v787 = vadd.f32 %v785, %v786
    %v788 = vsel %vm784, %v782, 0.0
    %v789 = vadd.f32 %v787, %v788
    %v790 = vsel %vm784, %v783, 0.0
    %v791 = vadd.f32 %v789, %v790
    %v792 = vrot.slane %v791, 4
    %v793 = vadd.f32 %v791, %v792
    %v794 = vrot.slane %v793, 2
    %v795 = vadd.f32 %v793, %v794
    %v796 = vrot.slane %v795, 1
    %v797 = vadd.f32 %v795, %v796
    %v798 = vld [vmem:[#allocation2] sm:$0x1]
    %800 = vset.pattern.permute.xlu0 0
    %801 = vperm.xlu0 %800, %v798
    %v802 = vpop.permute.xlu0 %801
    %v804 = vlaneseq
    %v805 = vshrl.u32 %v804, 7
    %v806 = vsub.s32 0, %v805
    %v807 = vrot.slane %v802, %v806
    %v808 = vadd.f32 %v797, %v807
    %vm809 = vcmask 24576
    %810 = vst.msk [vmem:[#allocation3] sm:$0x1] %vm809, %v808
    %811 = vst.msk [vmem:[%s10] sm:$0xff] %vm784, %v752
    %812 = vst.msk [vmem:[%s10 + $0x8] sm:$0xff] %vm784, %v753
    %813 = vst.msk [vmem:[%s10 + $0x10] sm:$0xff] %vm784, %v754
    %814 = vst.msk [vmem:[%s10 + $0x18] sm:$0xff] %vm784, %v755
    // Predicated region
    $region38: #{discriminator_forward.1} parent=1 // pred_check
      _
    $region39: #{discriminator_forward.1} parent=1 // pred_check_branch
      %816 = sbr.rel (0) target = $region41
    $region40: #{discriminator_forward.1} parent=1 // pred_region
      %s818 = ssub.s32 16, 16
      %819 = vsyncadd [#allocation4], %s818
      %s821 = sshll.u32 [#allocation3], 4
      %s822 = int_to_ptr.vmem [resolvable:$true] %s821
      %824 = dma.vmem_to_hbm [thread:$0]  %s822, 16, %s9, [#allocation4]
    $region41: #{discriminator_forward.1} parent=1 // pred_fallthru
      _
    // Predicated region
    $region42: #{discriminator_forward.1} parent=1 // pred_check
      _
    $region43: #{discriminator_forward.1} parent=1 // pred_check_branch
      %826 = sbr.rel (0) target = $region45
    $region44: #{discriminator_forward.1} parent=1 // pred_region
      _
    $region45: #{discriminator_forward.1} parent=1 // pred_fallthru
      _
    // Predicated region
    $region46: #{discriminator_forward.1} parent=1 // pred_check
      _
    $region47: #{discriminator_forward.1} parent=1 // pred_check_branch
      %828 = sbr.rel (0) target = $region49
    $region48: #{discriminator_forward.1} parent=1 // pred_region
      %829 = dma.done [#allocation4], 16
    $region49: #{discriminator_forward.1} parent=1 // pred_fallthru
      _
    // Predicated region
    $region50: #{discriminator_forward.1} parent=1 // pred_check
      _
    $region51: #{discriminator_forward.1} parent=1 // pred_check_branch
      %831 = sbr.rel (0) target = $region53
    $region52: #{discriminator_forward.1} parent=1 // pred_region
      _
    $region53: #{discriminator_forward.1} parent=1 // pred_fallthru
      _
    %832 = vsyncpa [#allocation4], 1

</llo_original>
